<compile_context>
chip_gen: v7x
topology: tpu7x:2x2x1
jax: 0.10.0
libtpu: 0.0.40
codegen_flags: <defaults>
</compile_context>

<pallas_src>
import functools

import jax
import jax.numpy as jnp
from jax import lax
from jax.experimental import pallas as pl
from jax.experimental.pallas import tpu as pltpu


def _self_attn_kernel(x_ref, xq_ref, wq_ref, bq_ref, wkv_ref, bkv_ref,
                      gamma_ref, out_ref, k_scr, v_scr, *, C8p, tq, exp_dtype):
    qi = pl.program_id(1)

    # --- K/V projection: once per batch element, cached in bf16 scratch. ----
    @pl.when(qi == 0)
    def _():
        kv = jnp.dot(wkv_ref[...], x_ref[...],
                     preferred_element_type=jnp.float32) + bkv_ref[...]  # (C8p+C, N) f32
        k_scr[...] = kv[:C8p].astype(jnp.bfloat16)
        v_scr[...] = kv[C8p:].astype(jnp.bfloat16)

    # --- Q projection for this tile; source slice from the resident bf16 row.
    start = pl.multiple_of(qi * tq, 128)
    x_q = x_ref[:, pl.ds(start, tq)]                                     # (C, TQ) bf16
    q = (jnp.dot(wq_ref[...], x_q, preferred_element_type=jnp.float32)
         + bq_ref[...]).astype(jnp.bfloat16)                             # (C8p, TQ)

    # --- Transposed scores: energy_T[j, i] = sum_c k[c, j] * q[c, i]. -------
    # bf16 operands, f32 accumulation; zero-padded channel rows contribute 0.
    energy_t = lax.dot_general(
        k_scr[...], q, dimension_numbers=(((0,), (0,)), ((), ())),
        preferred_element_type=jnp.float32)                              # (N, TQ) f32

    # --- Softmax statistics over the key axis (axis 0); normalization deferred.
    m = jnp.max(energy_t, axis=0, keepdims=True)                         # (1, TQ) f32
    p = jnp.exp((energy_t - m).astype(exp_dtype))                        # (N, TQ)
    l = jnp.sum(p, axis=0, keepdims=True, dtype=jnp.float32)             # (1, TQ) f32

    # --- PV: plain [C, N] @ [N, TQ]; no transposes; result lane-dense. ------
    o = lax.dot_general(
        v_scr[...], p.astype(jnp.bfloat16),
        dimension_numbers=(((1,), (0,)), ((), ())),
        preferred_element_type=jnp.float32)                              # (C, TQ) f32

    # --- Deferred normalization folded with gamma; f32 residual. ------------
    scale = gamma_ref[0] * pl.reciprocal(l, approx=True)                 # (1, TQ) f32
    out_ref[...] = (scale * o + xq_ref[...]).astype(out_ref.dtype)


def self_attn_forward(x_nchw, wq, bq, wk, bk, wv, bv, gamma, *, tq=None):
    """x_nchw: (B, C, W, H) float32. Returns (B, C, W, H) like the torch module."""
    B, C, W, H = x_nchw.shape
    N = W * H
    C8 = wq.shape[0]
    assert C % 8 == 0, "channel count must be a multiple of 8 for this kernel"
    assert N % 128 == 0, "W*H must be a multiple of 128 for lane-dense layout"
    C8p = max(8, ((C8 + 7) // 8) * 8)         # Q/K channel rows padded to sublanes

    # --- generation-dependent knobs (v5-class: no bf16 EUP; v7x: 64 MiB VMEM).
    kind = ""
    try:
        kind = jax.devices()[0].device_kind.lower()
    except Exception:
        pass
    old_gen = any(t in kind for t in ("v2", "v3", "v4", "v5"))
    is_v7 = ("v7" in kind) or ("7x" in kind)
    exp_dtype = jnp.float32 if old_gen else jnp.bfloat16

    # --- query-tile size ------------------------------------------------------
    if tq is None:
        cap = 256 if is_v7 else 512
        while cap > 128 and N * cap * 4 > (8 << 20):   # keep (N, TQ) f32 scores <= 8 MiB
            cap //= 2
        tq = N if N <= cap else next(t for t in (512, 384, 256, 128)
                                     if t <= cap and N % t == 0)
    assert tq % 128 == 0 and N % tq == 0
    # TODO(synk): add a flash-style key-axis tile (online softmax, third grid
    # axis 'arbitrary' + m/l/acc scratch) for very large feature maps where
    # even TQ=128 leaves an oversized (N, TQ) score block.

    # NCHW -> (B, C, N): pure reshape.  K/V/Q source is fed bf16 (halves the
    # big HBM read); the residual path stays f32 via the small per-tile input.
    x = x_nchw.reshape(B, C, N)
    x_bf16 = x.astype(jnp.bfloat16)

    # Pre-padded / fused / pre-cast weights (rows >= C8 of Q/K blocks are zero).
    wq_p = jnp.zeros((C8p, C), jnp.float32).at[:C8].set(wq).astype(jnp.bfloat16)
    bq_p = jnp.zeros((C8p, 1), jnp.float32).at[:C8, 0].set(bq)
    wkv_p = (jnp.zeros((C8p + C, C), jnp.float32)
             .at[:C8].set(wk).at[C8p:].set(wv).astype(jnp.bfloat16))
    bkv_p = (jnp.zeros((C8p + C, 1), jnp.float32)
             .at[:C8, 0].set(bk).at[C8p:, 0].set(bv))

    # --- VMEM budget derived from tile arithmetic (not a flat constant). -----
    exp_bytes = 2 if exp_dtype == jnp.bfloat16 else 4
    est = (
        2 * C * N * 2                          # bf16 x row (double-buffered)
        + 2 * C * tq * 4                       # f32 residual tile
        + 2 * C * tq * 4                       # output tile
        + 2 * (C8p * C + (C8p + C) * C) * 2    # bf16 weights (double-buffered)
        + 2 * (C8p + C8p + C) * 4              # f32 biases
        + (C8p + C) * N * 2                    # cached K/V bf16 scratch
        + max((C8p + C) * N * 4,               # transient f32 kv at q == 0
              N * tq * (4 + exp_bytes))        # energy_T (f32) + unnormalized p
        + C8p * tq * 6 + 2 * C * tq * 4        # q, o and slack
    )
    vmem_cap = (40 << 20) if is_v7 else (100 << 20)
    vmem_limit = min(vmem_cap, max(32 << 20, int(est * 1.3) + (2 << 20)))

    grid = (B, N // tq)
    out = pl.pallas_call(
        functools.partial(_self_attn_kernel, C8p=C8p, tq=tq, exp_dtype=exp_dtype),
        out_shape=jax.ShapeDtypeStruct((B, C, N), jnp.float32),
        grid=grid,
        in_specs=[
            # bf16 full spatial row (K/V source + Q-source slice).  Block index
            # is constant in the inner axis -> re-DMA'd only when b changes.
            pl.BlockSpec((None, C, N), lambda b, q: (b, 0, 0)),
            # f32 query tile of x (residual only).
            pl.BlockSpec((None, C, tq), lambda b, q: (b, 0, q)),
            pl.BlockSpec((C8p, C), lambda b, q: (0, 0)),        # Wq (padded, bf16)
            pl.BlockSpec((C8p, 1), lambda b, q: (0, 0)),        # bq (padded, f32)
            pl.BlockSpec((C8p + C, C), lambda b, q: (0, 0)),    # [Wk; Wv] fused bf16
            pl.BlockSpec((C8p + C, 1), lambda b, q: (0, 0)),    # [bk; bv] fused f32
            pl.BlockSpec(memory_space=pltpu.SMEM),              # gamma scalar
        ],
        out_specs=pl.BlockSpec((None, C, tq), lambda b, q: (b, 0, q)),
        scratch_shapes=[
            pltpu.VMEM((C8p, N), jnp.bfloat16),                 # cached K (per batch elem)
            pltpu.VMEM((C, N), jnp.bfloat16),                   # cached V (per batch elem)
        ],
        compiler_params=pltpu.CompilerParams(
            # b parallel (v7x megacore splits over batch); q 'arbitrary' so the
            # per-batch K/V scratch is reused sequentially across query tiles.
            # TODO(synk): for B == 1 on v7x, split the query axis across cores
            # (per-core K/V) instead, so the second TensorCore is not idle.
            dimension_semantics=("parallel", "arbitrary"),
            vmem_limit_bytes=vmem_limit,
        ),
    )(x_bf16, x, wq_p, bq_p, wkv_p, bkv_p, gamma)

    # (B, C, N) -> NCHW: pure reshape.
    return out.reshape(B, C, W, H)


def self_attn_reference(x_nchw, wq, bq, wk, bk, wv, bv, gamma):
    """Pure-JAX f32 reference mirroring the torch forward exactly."""
    B, C, W, H = x_nchw.shape
    N = W * H
    xf = x_nchw.reshape(B, C, N)                                   # (B, C, N)
    q = jnp.einsum('oc,bcn->bon', wq, xf) + bq[None, :, None]      # (B, C8, N)
    k = jnp.einsum('oc,bcn->bon', wk, xf) + bk[None, :, None]
    v = jnp.einsum('oc,bcn->bon', wv, xf) + bv[None, :, None]      # (B, C, N)
    energy = jnp.einsum('bci,bcj->bij', q, k)                      # (B, N, N)
    attn = jax.nn.softmax(energy, axis=-1)
    out = jnp.einsum('bcj,bij->bci', v, attn)                      # (B, C, N)
    out = out.reshape(B, C, W, H)
    return gamma[0] * out + x_nchw


if __name__ == "__main__":
    rng = jax.random.PRNGKey(0)
    # Torch initializes gamma to 0 (out == x trivially); use a nonzero value so
    # the attention path is actually exercised.
    gamma = jnp.array([0.5], dtype=jnp.float32)

    # 1) single query tile (tq == N); 2) forced tq=128 -> multi-tile grid that
    # exercises the cached-K/V reuse across q steps; 3) larger map, default tq.
    configs = [
        (2, 16, 16, 16, None),
        (2, 16, 16, 16, 128),
        (1, 32, 32, 32, None),
    ]
    for (B, C, W, H, tq) in configs:
        C8 = C // 8
        rng, kx, kwq, kbq, kwk, kbk, kwv, kbv = jax.random.split(rng, 8)
        x = jax.random.normal(kx, (B, C, W, H), dtype=jnp.float32)
        wq = 0.1 * jax.random.normal(kwq, (C8, C), dtype=jnp.float32)
        bq = 0.1 * jax.random.normal(kbq, (C8,), dtype=jnp.float32)
        wk = 0.1 * jax.random.normal(kwk, (C8, C), dtype=jnp.float32)
        bk = 0.1 * jax.random.normal(kbk, (C8,), dtype=jnp.float32)
        wv = 0.1 * jax.random.normal(kwv, (C, C), dtype=jnp.float32)
        bv = 0.1 * jax.random.normal(kbv, (C,), dtype=jnp.float32)

        out = self_attn_forward(x, wq, bq, wk, bk, wv, bv, gamma, tq=tq)
        out = jax.block_until_ready(out)
        ref = self_attn_reference(x, wq, bq, wk, bk, wv, bv, gamma)

        assert out.shape == (B, C, W, H)
        # bf16 MXU operands / bf16 exp (on v6e+) / bf16 x feed vs. an f32
        # reference -> bf16-appropriate tolerance; the residual path is f32.
        assert jnp.allclose(out, ref, atol=3e-2, rtol=3e-2), \
            f"mismatch vs reference at B={B} C={C} W={W} H={H} tq={tq}"

    print("KERNEL_OK")
</pallas_src>

<mosaic_0001>
module attributes {stable_mosaic.version = 11 : i64} {
  func.func @_self_attn_kernel(%arg0: i32, %arg1: i32, %arg2: memref<1x16x256xbf16, #tpu.memory_space<vmem>>, %arg3: memref<1x16x256xf32, #tpu.memory_space<vmem>>, %arg4: memref<8x16xbf16, #tpu.memory_space<vmem>>, %arg5: memref<8x1xf32, #tpu.memory_space<vmem>>, %arg6: memref<24x16xbf16, #tpu.memory_space<vmem>>, %arg7: memref<24x1xf32, #tpu.memory_space<vmem>>, %arg8: memref<1xf32, #tpu.memory_space<smem>>, %arg9: memref<1x16x256xf32, #tpu.memory_space<vmem>>, %arg10: memref<8x256xbf16, #tpu.memory_space<vmem>>, %arg11: memref<16x256xbf16, #tpu.memory_space<vmem>>) attributes {dimension_semantics = [#tpu.dimension_semantics<parallel>, #tpu.dimension_semantics<arbitrary>], iteration_bounds = array<i64: 2, 1>, scalar_prefetch = 0 : i64, scratch_operands = 2 : i64, tpu.core_type = #tpu.core_type<tc>, window_params = [{transform_indices = @transform_0, window_bounds = array<i64: 1, 16, 256>}, {transform_indices = @transform_1, window_bounds = array<i64: 1, 16, 256>}, {pipeline_mode = #tpu.pipeline_mode<synchronous>, transform_indices = @transform_2, window_bounds = array<i64: 8, 16>}, {pipeline_mode = #tpu.pipeline_mode<synchronous>, transform_indices = @transform_3, window_bounds = array<i64: 8, 1>}, {pipeline_mode = #tpu.pipeline_mode<synchronous>, transform_indices = @transform_4, window_bounds = array<i64: 24, 16>}, {pipeline_mode = #tpu.pipeline_mode<synchronous>, transform_indices = @transform_5, window_bounds = array<i64: 24, 1>}, {transform_indices = @transform_6, window_bounds = array<i64: 1>}, {transform_indices = @transform_7, window_bounds = array<i64: 1, 16, 256>}]} {
    %c0_i32 = arith.constant 0 : i32
    %0 = arith.cmpi eq, %arg1, %c0_i32 : i32
    %1 = arith.extui %0 : i1 to i32
    %c0_i32_0 = arith.constant 0 : i32
    %2 = arith.cmpi ne, %1, %c0_i32_0 : i32
    scf.if %2 {
      %c0_21 = arith.constant 0 : index
      %c0_22 = arith.constant 0 : index
      %39 = vector.load %arg6[%c0_21, %c0_22] : memref<24x16xbf16, #tpu.memory_space<vmem>>, vector<24x16xbf16>
      %c0_23 = arith.constant 0 : index
      %c0_24 = arith.constant 0 : index
      %c0_25 = arith.constant 0 : index
      %40 = vector.load %arg2[%c0_23, %c0_24, %c0_25] : memref<1x16x256xbf16, #tpu.memory_space<vmem>>, vector<1x16x256xbf16>
      %41 = vector.shape_cast %40 : vector<1x16x256xbf16> to vector<16x256xbf16>
      %cst_26 = arith.constant dense<0.000000e+00> : vector<24x256xf32>
      %42 = tpu.matmul %39, %41, %cst_26 {dimension_numbers = #tpu.dot_dimension_numbers<[1], [0], [0], [1], [0, 0, 1, 1], [], []>} : vector<24x16xbf16>, vector<16x256xbf16>, vector<24x256xf32> -> vector<24x256xf32>
      %c0_27 = arith.constant 0 : index
      %c0_28 = arith.constant 0 : index
      %43 = vector.load %arg7[%c0_27, %c0_28] : memref<24x1xf32, #tpu.memory_space<vmem>>, vector<24x1xf32>
      %44 = vector.broadcast %43 : vector<24x1xf32> to vector<24x256xf32>
      %45 = arith.addf %42, %44 : vector<24x256xf32>
      %46 = vector.extract_strided_slice %45 {offsets = [0, 0], sizes = [8, 256], strides = [1, 1]} : vector<24x256xf32> to vector<8x256xf32>
      %47 = arith.truncf %46 : vector<8x256xf32> to vector<8x256xbf16>
      %c0_29 = arith.constant 0 : index
      %c0_30 = arith.constant 0 : index
      %48 = vector.load %arg10[%c0_29, %c0_30] : memref<8x256xbf16, #tpu.memory_space<vmem>>, vector<8x256xbf16>
      tpu.vector_store %arg10[%c0_29, %c0_30], %47 {strides = array<i32>} : memref<8x256xbf16, #tpu.memory_space<vmem>>, vector<8x256xbf16>,
      %49 = vector.extract_strided_slice %45 {offsets = [8, 0], sizes = [16, 256], strides = [1, 1]} : vector<24x256xf32> to vector<16x256xf32>
      %50 = arith.truncf %49 : vector<16x256xf32> to vector<16x256xbf16>
      %c0_31 = arith.constant 0 : index
      %c0_32 = arith.constant 0 : index
      %51 = vector.load %arg11[%c0_31, %c0_32] : memref<16x256xbf16, #tpu.memory_space<vmem>>, vector<16x256xbf16>
      tpu.vector_store %arg11[%c0_31, %c0_32], %50 {strides = array<i32>} : memref<16x256xbf16, #tpu.memory_space<vmem>>, vector<16x256xbf16>,
    } else {
    }
    %c256_i32 = arith.constant 256 : i32
    %3 = arith.muli %arg1, %c256_i32 : i32
    %4 = tpu.assume_multiple %3, 128 : i32
    %c0 = arith.constant 0 : index
    %c0_1 = arith.constant 0 : index
    %5 = arith.index_cast %4 : i32 to index
    %6 = vector.load %arg2[%c0, %c0_1, %5] : memref<1x16x256xbf16, #tpu.memory_space<vmem>>, vector<1x16x256xbf16>
    %7 = vector.shape_cast %6 : vector<1x16x256xbf16> to vector<16x256xbf16>
    %c0_2 = arith.constant 0 : index
    %c0_3 = arith.constant 0 : index
    %8 = vector.load %arg4[%c0_2, %c0_3] : memref<8x16xbf16, #tpu.memory_space<vmem>>, vector<8x16xbf16>
    %cst = arith.constant dense<0.000000e+00> : vector<8x256xf32>
    %9 = tpu.matmul %8, %7, %cst {dimension_numbers = #tpu.dot_dimension_numbers<[1], [0], [0], [1], [0, 0, 1, 1], [], []>} : vector<8x16xbf16>, vector<16x256xbf16>, vector<8x256xf32> -> vector<8x256xf32>
    %c0_4 = arith.constant 0 : index
    %c0_5 = arith.constant 0 : index
    %10 = vector.load %arg5[%c0_4, %c0_5] : memref<8x1xf32, #tpu.memory_space<vmem>>, vector<8x1xf32>
    %11 = vector.broadcast %10 : vector<8x1xf32> to vector<8x256xf32>
    %12 = arith.addf %9, %11 : vector<8x256xf32>
    %13 = arith.truncf %12 : vector<8x256xf32> to vector<8x256xbf16>
    %c0_6 = arith.constant 0 : index
    %c0_7 = arith.constant 0 : index
    %14 = vector.load %arg10[%c0_6, %c0_7] : memref<8x256xbf16, #tpu.memory_space<vmem>>, vector<8x256xbf16>
    %cst_8 = arith.constant dense<0.000000e+00> : vector<256x256xf32>
    %15 = tpu.matmul %14, %13, %cst_8 {dimension_numbers = #tpu.dot_dimension_numbers<[0], [0], [1], [1], [0, 1, 1, 1], [], []>} : vector<8x256xbf16>, vector<8x256xbf16>, vector<256x256xf32> -> vector<256x256xf32>
    %cst_9 = arith.constant dense<0xFF800000> : vector<256xf32>
    %16 = vector.multi_reduction <maximumf>, %15, %cst_9 [0] : vector<256x256xf32> to vector<256xf32>
    %17 = vector.shape_cast %16 : vector<256xf32> to vector<1x256xf32>
    %18 = vector.broadcast %17 : vector<1x256xf32> to vector<256x256xf32>
    %19 = arith.subf %15, %18 : vector<256x256xf32>
    %20 = arith.truncf %19 : vector<256x256xf32> to vector<256x256xbf16>
    %21 = math.exp %20 : vector<256x256xbf16>
    %22 = arith.extf %21 : vector<256x256xbf16> to vector<256x256xf32>
    %cst_10 = arith.constant dense<0.000000e+00> : vector<256xf32>
    %23 = vector.multi_reduction <add>, %22, %cst_10 [0] : vector<256x256xf32> to vector<256xf32>
    %24 = vector.shape_cast %23 : vector<256xf32> to vector<1x256xf32>
    %c0_11 = arith.constant 0 : index
    %c0_12 = arith.constant 0 : index
    %25 = vector.load %arg11[%c0_11, %c0_12] : memref<16x256xbf16, #tpu.memory_space<vmem>>, vector<16x256xbf16>
    %cst_13 = arith.constant dense<0.000000e+00> : vector<16x256xf32>
    %26 = tpu.matmul %25, %21, %cst_13 {dimension_numbers = #tpu.dot_dimension_numbers<[1], [0], [0], [1], [0, 0, 1, 1], [], []>} : vector<16x256xbf16>, vector<256x256xbf16>, vector<16x256xf32> -> vector<16x256xf32>
    %c0_14 = arith.constant 0 : index
    %27 = memref.load %arg8[%c0_14] : memref<1xf32, #tpu.memory_space<smem>>
    %28 = tpu.reciprocal %24 {approx = true} : vector<1x256xf32> -> vector<1x256xf32>
    %29 = vector.broadcast %27 : f32 to vector<1x256xf32>
    %30 = arith.mulf %29, %28 : vector<1x256xf32>
    %31 = vector.broadcast %30 : vector<1x256xf32> to vector<16x256xf32>
    %32 = arith.mulf %31, %26 : vector<16x256xf32>
    %c0_15 = arith.constant 0 : index
    %c0_16 = arith.constant 0 : index
    %c0_17 = arith.constant 0 : index
    %33 = vector.load %arg3[%c0_15, %c0_16, %c0_17] : memref<1x16x256xf32, #tpu.memory_space<vmem>>, vector<1x16x256xf32>
    %34 = vector.shape_cast %33 : vector<1x16x256xf32> to vector<16x256xf32>
    %35 = arith.addf %32, %34 : vector<16x256xf32>
    %c0_18 = arith.constant 0 : index
    %c0_19 = arith.constant 0 : index
    %c0_20 = arith.constant 0 : index
    %36 = vector.load %arg9[%c0_18, %c0_19, %c0_20] : memref<1x16x256xf32, #tpu.memory_space<vmem>>, vector<1x16x256xf32>
    %37 = vector.shape_cast %36 : vector<1x16x256xf32> to vector<16x256xf32>
    %38 = vector.shape_cast %35 : vector<16x256xf32> to vector<1x16x256xf32>
    tpu.vector_store %arg9[%c0_18, %c0_19, %c0_20], %38 {strides = array<i32>} : memref<1x16x256xf32, #tpu.memory_space<vmem>>, vector<1x16x256xf32>,
    return
  }
  func.func @transform_0(%arg0: i32, %arg1: i32) -> (i32, i32, i32) {
    %c0_i32 = arith.constant 0 : i32
    %c0_i32_0 = arith.constant 0 : i32
    %c0_i32_1 = arith.constant 0 : i32
    return %arg0, %c0_i32, %c0_i32_0 : i32, i32, i32
  }
  func.func @transform_1(%arg0: i32, %arg1: i32) -> (i32, i32, i32) {
    %c0_i32 = arith.constant 0 : i32
    %c0_i32_0 = arith.constant 0 : i32
    return %arg0, %c0_i32, %arg1 : i32, i32, i32
  }
  func.func @transform_2(%arg0: i32, %arg1: i32) -> (i32, i32) {
    %c0_i32 = arith.constant 0 : i32
    %c0_i32_0 = arith.constant 0 : i32
    %c0_i32_1 = arith.constant 0 : i32
    return %c0_i32, %c0_i32_0 : i32, i32
  }
  func.func @transform_3(%arg0: i32, %arg1: i32) -> (i32, i32) {
    %c0_i32 = arith.constant 0 : i32
    %c0_i32_0 = arith.constant 0 : i32
    %c0_i32_1 = arith.constant 0 : i32
    return %c0_i32, %c0_i32_0 : i32, i32
  }
  func.func @transform_4(%arg0: i32, %arg1: i32) -> (i32, i32) {
    %c0_i32 = arith.constant 0 : i32
    %c0_i32_0 = arith.constant 0 : i32
    %c0_i32_1 = arith.constant 0 : i32
    return %c0_i32, %c0_i32_0 : i32, i32
  }
  func.func @transform_5(%arg0: i32, %arg1: i32) -> (i32, i32) {
    %c0_i32 = arith.constant 0 : i32
    %c0_i32_0 = arith.constant 0 : i32
    %c0_i32_1 = arith.constant 0 : i32
    return %c0_i32, %c0_i32_0 : i32, i32
  }
  func.func @transform_6(%arg0: i32, %arg1: i32) -> i32 {
    %c0_i32 = arith.constant 0 : i32
    %c0_i32_0 = arith.constant 0 : i32
    return %c0_i32 : i32
  }
  func.func @transform_7(%arg0: i32, %arg1: i32) -> (i32, i32, i32) {
    %c0_i32 = arith.constant 0 : i32
    %c0_i32_0 = arith.constant 0 : i32
    return %arg0, %c0_i32, %arg1 : i32, i32, i32
  }
}

</mosaic_0001>

<llo_original>
// kernel: tpu_custom_call.1
$region0: #{tpu_custom_call.1}
  #allocation0 [shape = 'u32[]', space=smem, size = 0x4, offset = 0x4, fixed_abs, tag = 'smem constant byte address 0x4 - core index']
  #allocation1 [shape = 'u32[144,128]{1,0:T(1,128)}', space=vmem, size = 0x12000, scoped, tag = 'internal scratch']
  #allocation2 [shape = 'bf16[8,256]{1,0:T(8,128)(2,1)}', space=vmem, size = 0x1000, scoped, tag = 'scratch operand']
  #allocation3 [shape = 'bf16[16,256]{1,0:T(16,128)(2,1)}', space=vmem, size = 0x2000, scoped, tag = 'scratch operand']
  #allocation4 [shape = 'f32[1]{0:T(128)S(6)}', space=smem, size = 0x200, scoped, tag = 'scoped memory for tpu_custom_call.1']
  %s0 = inlined_call_operand.vmem [shape: bf16[2,16,256], index: 0, kind: input, shape index: {}]
  %s1 = inlined_call_operand.hbm [shape: f32[2,16,256], index: 1, kind: input, shape index: {}]
  %s2 = inlined_call_operand.vmem [shape: bf16[8,16], index: 2, kind: input, shape index: {}]
  %s3 = inlined_call_operand.vmem [shape: f32[8,1], index: 3, kind: input, shape index: {}]
  %s4 = inlined_call_operand.vmem [shape: bf16[24,16], index: 4, kind: input, shape index: {}]
  %s5 = inlined_call_operand.vmem [shape: f32[24,1], index: 5, kind: input, shape index: {}]
  %s6 = inlined_call_operand.<no memory space> [shape: f32[1], index: 6, kind: input, shape index: {}]
  %s7 = inlined_call_operand.hbm [shape: f32[2,16,256], index: 7, kind: output, shape index: {}]
  %s8 = sld [smem:[#allocation0]]
  $region69: #{tpu_custom_call.1} parent=0
    _
  %s10 = ssub.s32 1, %s8
  %s11 = scalar_select 0, %s10, %s8
  %12 = sst [smem:[#allocation4]] %s6
  $region1: #{tpu_custom_call.1} parent=0
    #allocation5 [shape = 'u8[32768]{0}', space=vmem, size = 0x8000, scoped, tag = 'input window, operand 1']
    #allocation6 [shape = 's32[2]{0}', space=sflag, size = 0x8, scoped, tag = 'scoped memory for tpu_custom_call.1']
    #allocation7 [shape = 's32[2]{0}', space=sflag, size = 0x8, scoped, tag = 'scoped memory for tpu_custom_call.1']
    #allocation8 [shape = 'u8[32768]{0}', space=vmem, size = 0x8000, scoped, tag = 'output window, operand 0']
    %13 = vsyncpa [#allocation6], 0
    %s14 = scalar_lea.sflag [#allocation6], 1
    %15 = vsyncpa %s14, 0
    %16 = vsyncpa [#allocation7], 0
    %s17 = scalar_lea.sflag [#allocation7], 1
    %18 = vsyncpa %s17, 0
    loop: start=0, step=1, limit=4
    $region2: #{tpu_custom_call.1} parent=1 // loop_pre_header
      _
    $region3: #{tpu_custom_call.1} parent=1 // loop_header
      %s20 = sphi 0, %s24
      %p21 = scmp.ge.s32.totalorder %s20, 4
      %s27 = sphi 0, %s39
      %s28 = sphi 0, %s35
      %s29 = sphi 0, %s27
      %s30 = sphi 0, %s28
      %s31 = sphi 0, %s29
      %s32 = sphi 0, %s30
      %s42 = sphi 0, %s44
      %s45 = sphi 0, %s42
      %s46 = sphi 0, %s45
      %s62 = sphi 0, %s46
      %s70 = sphi 0, %s72
      %s73 = sphi 0, %s70
      %s74 = sphi 0, %s73
      %s90 = sphi 0, %s74
      %s94 = sphi 0, %s94
      %s96 = sphi 0, %s94
      %s97 = sphi 0, %s96
      %s111 = sphi 0, %s97
      %s115 = sphi 0, %s115
      %s117 = sphi 0, %s115
      %s118 = sphi 0, %s117
      %s132 = sphi 0, %s118
      %s136 = sphi 0, %s136
      %s138 = sphi 0, %s136
      %s139 = sphi 0, %s138
      %s153 = sphi 0, %s139
      %s157 = sphi 0, %s157
      %s159 = sphi 0, %s157
      %s160 = sphi 0, %s159
      %s174 = sphi 0, %s160
      %s178 = sphi 0, %s178
      %s180 = sphi 0, %s178
      %s181 = sphi 0, %s180
      %s195 = sphi 0, %s181
      %s203 = sphi 0, %s205
      %s206 = sphi 0, %s203
      %s207 = sphi 0, %s206
      %s223 = sphi 0, %s207
    $region4: #{tpu_custom_call.1} parent=1 // loop_header_branch
      %23 = sbr.rel (%p21) target = $region8
    $region5: #{tpu_custom_call.1} parent=1 // loop_body
      %s25 = ssub.s32 %s20, 1
      %s26 = ssub.s32 %s20, 2
      %s33 = sadd.s32 1, %s28
      %p34 = scmp.ge.s32.totalorder %s33, 1
      %s35 = scalar_select %p34, 0, %s33
      %s36 = sadd.s32 1, %s27
      %s37 = scalar_select %p34, %s36, %s27
      %p38 = scmp.ge.s32.totalorder %s37, 2
      %s39 = scalar_select %p38, 0, %s37
      %s40 = ssub.s32 %s27, %s39
      %p41 = scmp.eq.s32.totalorder %s40, 0
      %s43 = sadd.s32 %s42, 1
      %s44 = scalar_select %p41, %s42, %s43
      %p47 = pneg %p41
      %p48 = scmp.eq.s32.totalorder %s20, 1
      %p49 = por %p47, %p48
      %p50 = scmp.ne.s32.totalorder %s42, %s45
      %p51 = scmp.eq.s32.totalorder %s20, 0
      %p52 = por %p50, %p51
      %p53 = scmp.ne.s32.totalorder %s42, %s45
      %p54 = scmp.eq.s32.totalorder %s25, 1
      %p55 = por %p53, %p54
      %p56 = scmp.ne.s32.totalorder %s45, %s46
      %p57 = scmp.eq.s32.totalorder %s25, 0
      %p58 = por %p56, %p57
      %p59 = scmp.ne.s32.totalorder %s45, %s46
      %p60 = scmp.eq.s32.totalorder %s26, 1
      %p61 = por %p59, %p60
      %p63 = scmp.ne.s32.totalorder %s46, %s62
      %p64 = scmp.eq.s32.totalorder %s26, 0
      %p65 = por %p63, %p64
      %s66 = ssub.s32 %s27, %s39
      %s67 = ssub.s32 %s28, %s35
      %s68 = sor.u32 %s66, %s67
      %p69 = scmp.eq.s32.totalorder %s68, 0
      %s71 = sadd.s32 %s70, 1
      %s72 = scalar_select %p69, %s70, %s71
      %p75 = pneg %p69
      %p76 = scmp.eq.s32.totalorder %s20, 1
      %p77 = por %p75, %p76
      %p78 = scmp.ne.s32.totalorder %s70, %s73
      %p79 = scmp.eq.s32.totalorder %s20, 0
      %p80 = por %p78, %p79
      %p81 = scmp.ne.s32.totalorder %s70, %s73
      %p82 = scmp.eq.s32.totalorder %s25, 1
      %p83 = por %p81, %p82
      %p84 = scmp.ne.s32.totalorder %s73, %s74
      %p85 = scmp.eq.s32.totalorder %s25, 0
      %p86 = por %p84, %p85
      %p87 = scmp.ne.s32.totalorder %s73, %s74
      %p88 = scmp.eq.s32.totalorder %s26, 1
      %p89 = por %p87, %p88
      %p91 = scmp.ne.s32.totalorder %s74, %s90
      %p92 = scmp.eq.s32.totalorder %s26, 0
      %p93 = por %p91, %p92
      %s95 = sadd.s32 %s94, 1
      %p98 = scmp.eq.s32.totalorder %s20, 1
      %p99 = scmp.ne.s32.totalorder %s94, %s96
      %p100 = scmp.eq.s32.totalorder %s20, 0
      %p101 = por %p99, %p100
      %p102 = scmp.ne.s32.totalorder %s94, %s96
      %p103 = scmp.eq.s32.totalorder %s25, 1
      %p104 = por %p102, %p103
      %p105 = scmp.ne.s32.totalorder %s96, %s97
      %p106 = scmp.eq.s32.totalorder %s25, 0
      %p107 = por %p105, %p106
      %p108 = scmp.ne.s32.totalorder %s96, %s97
      %p109 = scmp.eq.s32.totalorder %s26, 1
      %p110 = por %p108, %p109
      %p112 = scmp.ne.s32.totalorder %s97, %s111
      %p113 = scmp.eq.s32.totalorder %s26, 0
      %p114 = por %p112, %p113
      %s116 = sadd.s32 %s115, 1
      %p119 = scmp.eq.s32.totalorder %s20, 1
      %p120 = scmp.ne.s32.totalorder %s115, %s117
      %p121 = scmp.eq.s32.totalorder %s20, 0
      %p122 = por %p120, %p121
      %p123 = scmp.ne.s32.totalorder %s115, %s117
      %p124 = scmp.eq.s32.totalorder %s25, 1
      %p125 = por %p123, %p124
      %p126 = scmp.ne.s32.totalorder %s117, %s118
      %p127 = scmp.eq.s32.totalorder %s25, 0
      %p128 = por %p126, %p127
      %p129 = scmp.ne.s32.totalorder %s117, %s118
      %p130 = scmp.eq.s32.totalorder %s26, 1
      %p131 = por %p129, %p130
      %p133 = scmp.ne.s32.totalorder %s118, %s132
      %p134 = scmp.eq.s32.totalorder %s26, 0
      %p135 = por %p133, %p134
      %s137 = sadd.s32 %s136, 1
      %p140 = scmp.eq.s32.totalorder %s20, 1
      %p141 = scmp.ne.s32.totalorder %s136, %s138
      %p142 = scmp.eq.s32.totalorder %s20, 0
      %p143 = por %p141, %p142
      %p144 = scmp.ne.s32.totalorder %s136, %s138
      %p145 = scmp.eq.s32.totalorder %s25, 1
      %p146 = por %p144, %p145
      %p147 = scmp.ne.s32.totalorder %s138, %s139
      %p148 = scmp.eq.s32.totalorder %s25, 0
      %p149 = por %p147, %p148
      %p150 = scmp.ne.s32.totalorder %s138, %s139
      %p151 = scmp.eq.s32.totalorder %s26, 1
      %p152 = por %p150, %p151
      %p154 = scmp.ne.s32.totalorder %s139, %s153
      %p155 = scmp.eq.s32.totalorder %s26, 0
      %p156 = por %p154, %p155
      %s158 = sadd.s32 %s157, 1
      %p161 = scmp.eq.s32.totalorder %s20, 1
      %p162 = scmp.ne.s32.totalorder %s157, %s159
      %p163 = scmp.eq.s32.totalorder %s20, 0
      %p164 = por %p162, %p163
      %p165 = scmp.ne.s32.totalorder %s157, %s159
      %p166 = scmp.eq.s32.totalorder %s25, 1
      %p167 = por %p165, %p166
      %p168 = scmp.ne.s32.totalorder %s159, %s160
      %p169 = scmp.eq.s32.totalorder %s25, 0
      %p170 = por %p168, %p169
      %p171 = scmp.ne.s32.totalorder %s159, %s160
      %p172 = scmp.eq.s32.totalorder %s26, 1
      %p173 = por %p171, %p172
      %p175 = scmp.ne.s32.totalorder %s160, %s174
      %p176 = scmp.eq.s32.totalorder %s26, 0
      %p177 = por %p175, %p176
      %s179 = sadd.s32 %s178, 1
      %p182 = scmp.eq.s32.totalorder %s20, 1
      %p183 = scmp.ne.s32.totalorder %s178, %s180
      %p184 = scmp.eq.s32.totalorder %s20, 0
      %p185 = por %p183, %p184
      %p186 = scmp.ne.s32.totalorder %s178, %s180
      %p187 = scmp.eq.s32.totalorder %s25, 1
      %p188 = por %p186, %p187
      %p189 = scmp.ne.s32.totalorder %s180, %s181
      %p190 = scmp.eq.s32.totalorder %s25, 0
      %p191 = por %p189, %p190
      %p192 = scmp.ne.s32.totalorder %s180, %s181
      %p193 = scmp.eq.s32.totalorder %s26, 1
      %p194 = por %p192, %p193
      %p196 = scmp.ne.s32.totalorder %s181, %s195
      %p197 = scmp.eq.s32.totalorder %s26, 0
      %p198 = por %p196, %p197
      %s199 = ssub.s32 %s27, %s39
      %s200 = ssub.s32 %s28, %s35
      %s201 = sor.u32 %s199, %s200
      %p202 = scmp.eq.s32.totalorder %s201, 0
      %s204 = sadd.s32 %s203, 1
      %s205 = scalar_select %p202, %s203, %s204
      %p208 = pneg %p202
      %p209 = scmp.eq.s32.totalorder %s20, 1
      %p210 = por %p208, %p209
      %p211 = scmp.ne.s32.totalorder %s203, %s206
      %p212 = scmp.eq.s32.totalorder %s20, 0
      %p213 = por %p211, %p212
      %p214 = scmp.ne.s32.totalorder %s203, %s206
      %p215 = scmp.eq.s32.totalorder %s25, 1
      %p216 = por %p214, %p215
      %p217 = scmp.ne.s32.totalorder %s206, %s207
      %p218 = scmp.eq.s32.totalorder %s25, 0
      %p219 = por %p217, %p218
      %p220 = scmp.ne.s32.totalorder %s206, %s207
      %p221 = scmp.eq.s32.totalorder %s26, 1
      %p222 = por %p220, %p221
      %p224 = scmp.ne.s32.totalorder %s207, %s223
      %p225 = scmp.eq.s32.totalorder %s26, 0
      %p226 = por %p224, %p225
      %p227 = scmp.le.s32.totalorder 1, %s20
      %p228 = scmp.lt.s32.totalorder %s20, 3
      %p229 = pnand %p227, %p228
      %p230 = pneg %p229
      // Predicated region
      $region9: #{tpu_custom_call.1} parent=5 // pred_check
        _
      $region10: #{tpu_custom_call.1} parent=5 // pred_check_branch
        %232 = sbr.rel (%p229) target = $region12
      $region11: #{tpu_custom_call.1} parent=5 // pred_region
        %s233 = ssub.s32 %s20, 1
        // Predicated region
        $region13: #{tpu_custom_call.1} parent=11 // pred_check
          %p234 = pneg %p107
        $region14: #{tpu_custom_call.1} parent=11 // pred_check_branch
          %236 = sbr.rel (%p234) target = $region16
        $region15: #{tpu_custom_call.1} parent=11 // pred_region
          _
        $region16: #{tpu_custom_call.1} parent=11 // pred_fallthru
          _
        // Predicated region
        $region17: #{tpu_custom_call.1} parent=11 // pred_check
          %p237 = pneg %p128
        $region18: #{tpu_custom_call.1} parent=11 // pred_check_branch
          %239 = sbr.rel (%p237) target = $region20
        $region19: #{tpu_custom_call.1} parent=11 // pred_region
          _
        $region20: #{tpu_custom_call.1} parent=11 // pred_fallthru
          _
        // Predicated region
        $region21: #{tpu_custom_call.1} parent=11 // pred_check
          %p240 = pneg %p149
        $region22: #{tpu_custom_call.1} parent=11 // pred_check_branch
          %242 = sbr.rel (%p240) target = $region24
        $region23: #{tpu_custom_call.1} parent=11 // pred_region
          _
        $region24: #{tpu_custom_call.1} parent=11 // pred_fallthru
          _
        // Predicated region
        $region25: #{tpu_custom_call.1} parent=11 // pred_check
          %p243 = pneg %p170
        $region26: #{tpu_custom_call.1} parent=11 // pred_check_branch
          %245 = sbr.rel (%p243) target = $region28
        $region27: #{tpu_custom_call.1} parent=11 // pred_region
          _
        $region28: #{tpu_custom_call.1} parent=11 // pred_fallthru
          _
        // Predicated region
        $region29: #{tpu_custom_call.1} parent=11 // pred_check
          %p246 = pneg %p191
        $region30: #{tpu_custom_call.1} parent=11 // pred_check_branch
          %248 = sbr.rel (%p246) target = $region32
        $region31: #{tpu_custom_call.1} parent=11 // pred_region
          _
        $region32: #{tpu_custom_call.1} parent=11 // pred_fallthru
          _
      $region12: #{tpu_custom_call.1} parent=5 // pred_fallthru
        _
      %p249 = scmp.lt.s32.totalorder %s20, 2
      // Predicated region
      $region33: #{tpu_custom_call.1} parent=5 // pred_check
        %p250 = pneg %p249
      $region34: #{tpu_custom_call.1} parent=5 // pred_check_branch
        %252 = sbr.rel (%p250) target = $region36
      $region35: #{tpu_custom_call.1} parent=5 // pred_region
        // Predicated region
        $region37: #{tpu_custom_call.1} parent=35 // pred_check
          %p253 = pneg %p52
        $region38: #{tpu_custom_call.1} parent=35 // pred_check_branch
          %255 = sbr.rel (%p253) target = $region40
        $region39: #{tpu_custom_call.1} parent=35 // pred_region
          %p256 = scmp.lt.s32.totalorder %s27, 1
          %s257 = scalar_select %p256, %s27, 1
          %s258 = smul.addr %s257, 4
          %s259 = smul.addr %s258, 4
          %s260 = scalar_lea.vmem %s0, %s259
        $region40: #{tpu_custom_call.1} parent=35 // pred_fallthru
          _
        // Predicated region
        $region41: #{tpu_custom_call.1} parent=35 // pred_check
          %p261 = pneg %p80
        $region42: #{tpu_custom_call.1} parent=35 // pred_check_branch
          %263 = sbr.rel (%p261) target = $region44
        $region43: #{tpu_custom_call.1} parent=35 // pred_region
          %s264 = sand.u32 %s70, 1
          %s265 = scalar_lea.sflag [#allocation6], %s264
          %s266 = sand.u32 %s70, 1
          %s267 = smul.addr %s266, 32
          %s268 = scalar_lea.vmem [#allocation5], %s267
          %s269 = smul.u32 2, %s28
          %s271 = ssub.s32 512, 512
          %272 = vsyncadd %s265, %s271
          %s273 = smul.addr %s27, 4
          %s274 = sadd.s32 %s269, %s273
          %s275 = smul.addr %s274, 128
          %s276 = scalar_lea.hbm %s1, %s275
          %s277 = sshll.u32 %s268, 4
          %s278 = int_to_ptr.vmem [resolvable:$true] %s277
          %283 = dma.hbm_to_vmem [thread:$0]  %s276, 512, %s278, %s265, 256, 256, 16
        $region44: #{tpu_custom_call.1} parent=35 // pred_fallthru
          _
      $region36: #{tpu_custom_call.1} parent=5 // pred_fallthru
        _
      %p284 = scmp.le.s32.totalorder 1, %s20
      %p285 = scmp.lt.s32.totalorder %s20, 3
      %p286 = pnand %p284, %p285
      %p287 = pneg %p286
      // Predicated region
      $region45: #{tpu_custom_call.1} parent=5 // pred_check
        _
      $region46: #{tpu_custom_call.1} parent=5 // pred_check_branch
        %289 = sbr.rel (%p286) target = $region48
      $region47: #{tpu_custom_call.1} parent=5 // pred_region
        %s290 = ssub.s32 %s20, 1
        %s291 = sand.u32 %s73, 1
        %s292 = scalar_lea.sflag [#allocation6], %s291
        %s293 = sand.u32 %s73, 1
        %s294 = smul.addr %s293, 32
        %s295 = scalar_lea.vmem [#allocation5], %s294
        // Predicated region
        $region49: #{tpu_custom_call.1} parent=47 // pred_check
          %p296 = pneg %p86
        $region50: #{tpu_custom_call.1} parent=47 // pred_check_branch
          %298 = sbr.rel (%p296) target = $region52
        $region51: #{tpu_custom_call.1} parent=47 // pred_region
          %299 = dma.done %s292, 512
        $region52: #{tpu_custom_call.1} parent=47 // pred_fallthru
          _
        %p300 = scmp.lt.s32.totalorder %s29, 1
        %s301 = scalar_select %p300, %s29, 1
        %s302 = smul.addr %s301, 4
        %s303 = smul.addr %s302, 4
        %s304 = scalar_lea.vmem %s0, %s303
        %p305 = pneg %p58
        %p306 = pneg %p55
        %s307 = sand.u32 %s73, 1
        %s308 = scalar_lea.sflag [#allocation6], %s307
        %s309 = sand.u32 %s73, 1
        %s310 = smul.addr %s309, 32
        %s311 = scalar_lea.vmem [#allocation5], %s310
        %p312 = pneg %p86
        %p313 = pneg %p83
        %p314 = pneg %p107
        %p315 = pneg %p104
        %p316 = pneg %p128
        %p317 = pneg %p125
        %p318 = pneg %p149
        %p319 = pneg %p146
        %p320 = pneg %p170
        %p321 = pneg %p167
        %p322 = pneg %p191
        %p323 = pneg %p188
        %p324 = pneg %p219
        %p325 = pneg %p216
        %s326 = sand.u32 %s206, 1
        %s327 = scalar_lea.sflag [#allocation7], %s326
        %s328 = sand.u32 %s206, 1
        %s329 = smul.addr %s328, 32
        %s330 = scalar_lea.vmem [#allocation8], %s329
        %p331 = scmp.lt.s32.totalorder %s29, 1
        %s332 = scalar_select %p331, %s29, 1
        %s333 = smul.addr %s332, 4
        %s334 = smul.addr %s333, 4
        %s335 = scalar_lea.vmem %s0, %s334
        %s336 = smul.u32 2, %s30
        %s337 = smul.u32 2, %s30
        %p339 = scmp.eq.s32.totalorder %s30, 0
        // Predicated region
        $region53: #{tpu_custom_call.1} parent=47 // pred_check
          %p340 = pneg %p339
        $region54: #{tpu_custom_call.1} parent=47 // pred_check_branch
          %342 = sbr.rel (%p340) target = $region56
        $region55: #{tpu_custom_call.1} parent=47 // pred_region
          %v343 = vld [vmem:[%s4] sm:$0xf]
          %v344 = vld [vmem:[%s4 + $0x4] sm:$0xf]
          %v345 = vld [vmem:[%s4 + $0x8] sm:$0xf]
          %v346 = vld [vmem:[%s335] sm:$0xff]
          %v347 = vld [vmem:[%s335 + $0x8] sm:$0xff]
          %v348 = vld [vmem:[%s5] sm:$0xff]
          %v349 = vld [vmem:[%s5 + $0x8] sm:$0xff]
          %v350 = vld [vmem:[%s5 + $0x10] sm:$0xff]
          %352 = vset.pattern.permute.xlu0 0
          %353 = vperm.xlu0 %352, %v348
          %v354 = vpop.permute.xlu0 %353
          %357 = vset.pattern.permute.xlu0 0
          %358 = vperm.xlu0 %357, %v349
          %v359 = vpop.permute.xlu0 %358
          %362 = vset.pattern.permute.xlu0 0
          %363 = vperm.xlu0 %362, %v350
          %v364 = vpop.permute.xlu0 %363
          %v369 = vunpack.c.l.b16 %v343
          %v370 = vunpack.c.l.b16 %v344
          %v371 = vunpack.c.l.b16 %v345
          %v372 = vpack.c.b16 %v370, %v369
          %v373 = vpack.c.b16 %v371, %v371
          %v376 = vunpack.c.l.b16 %v346
          %v377 = vunpack.c.h.b16 %v346
          %v378 = vunpack.c.l.b16 %v347
          %v379 = vunpack.c.h.b16 %v347
          %v380 = vpack.c.b16 %v378, %v376
          %v381 = vpack.c.b16 %v379, %v377
          %vm384 = vcmask 130048
          %v386 = vsel %vm384, %v372, 0
          %v389 = vsel %vm384, %v373, 0
          %391 = vmatprep.subr.bf16.mxu0 %v381
          %392 = vmatpush1.bf16.msra.mxu0 %v380
          %393 = vmatprep.subr.bf16.mxu0 0
          %394 = vmatpush1.bf16.msra.mxu0 0
          %395 = vmatprep.subr.bf16.mxu0 0
          %396 = vmatpush1.bf16.msra.mxu0 0
          %397 = vmatprep.subr.bf16.mxu0 0
          %398 = vmatpush1.bf16.msra.mxu0 0
          %399 = vmatprep.subr.bf16.mxu0 0
          %400 = vmatpush1.bf16.msra.mxu0 0
          %401 = vmatprep.subr.bf16.mxu0 0
          %402 = vmatpush1.bf16.msra.mxu0 0
          %403 = vmatprep.subr.bf16.mxu0 0
          %404 = vmatpush1.bf16.msra.mxu0 0
          %405 = vmatprep.subr.bf16.mxu0 0
          %406 = vmatpush1.bf16.msra.mxu0 0
          %407 = vmatprep.subr.bf16.mxu0 0
          %408 = vmatpush1.bf16.msra.mxu0 0
          %409 = vmatprep.subr.bf16.mxu0 0
          %410 = vmatpush1.bf16.msra.mxu0 0
          %411 = vmatprep.subr.bf16.mxu0 0
          %412 = vmatpush1.bf16.msra.mxu0 0
          %413 = vmatprep.subr.bf16.mxu0 0
          %414 = vmatpush1.bf16.msra.mxu0 0
          %415 = vmatprep.subr.bf16.mxu0 0
          %416 = vmatpush1.bf16.msra.mxu0 0
          %417 = vmatprep.subr.bf16.mxu0 0
          %418 = vmatpush1.bf16.msra.mxu0 0
          %419 = vmatprep.subr.bf16.mxu0 0
          %420 = vmatpush1.bf16.msra.mxu0 0
          %421 = vmatprep.subr.bf16.mxu0 0
          %422 = vmatpush1.bf16.msra.mxu0 0
          %423 = vmatprep.mubr.bf16.mxu0 0
          %424 = vmatmul.mubr.bf16.gmra.mrb[0].mxu0 %v386
          %v425 = vpop.f32.mrb[0].mxu0
          %v426 = vadd.f32 %v354, %v425
          %v427 = vpop.f32.mrb[0].mxu0
          %v428 = vadd.f32 %v354, %v427
          %v429 = vpop.f32.mrb[0].mxu0
          %v430 = vadd.f32 %v359, %v429
          %v431 = vpop.f32.mrb[0].mxu0
          %v432 = vadd.f32 %v359, %v431
          %433 = vmatprep.mubr.bf16.mxu0 0
          %434 = vmatmul.mubr.bf16.gmra.mrb[0].mxu0 %v389
          %v435 = vpop.f32.mrb[0].mxu0
          %v436 = vadd.f32 %v364, %v435
          %v437 = vpop.f32.mrb[0].mxu0
          %v438 = vadd.f32 %v364, %v437
          %v439 = vpop.f32.mrb[0].mxu0
          %v440 = vpop.f32.mrb[0].mxu0
          %441 = vdwg.mxu0
          %v442 = vpack.c.bf16 %v426, %v426
          %v443 = vpack.c.bf16 %v428, %v428
          %v446 = vunpack.c.l.b16 %v442
          %v447 = vunpack.c.l.b16 %v443
          %v448 = vpack.c.b16 %v447, %v446
          %450 = vst [vmem:[#allocation2] sm:$0xff] %v448
          %v451 = vpack.c.bf16 %v436, %v430
          %v452 = vpack.c.bf16 %v438, %v432
          %453 = vst [vmem:[#allocation3] sm:$0xff] %v451
          %454 = vst [vmem:[#allocation3 + $0x8] sm:$0xff] %v452
        $region56: #{tpu_custom_call.1} parent=47 // pred_fallthru
          _
        %s455 = smul.u32 %s30, 256
        %s456 = sshra.s32 %s455, 7
        %s457 = sand.u32 %s455, 127
        %s458 = smul.addr %s456, 4
        %s459 = scalar_lea.vmem %s335, %s458
        %v460 = vld [vmem:[%s459] sm:$0xff]
        %v461 = vld [vmem:[%s459 + $0x8] sm:$0xff]
        %v462 = vld [vmem:[%s2] sm:$0xf]
        %v463 = vld [vmem:[%s3] sm:$0xff]
        %465 = vset.pattern.permute.xlu0 0
        %466 = vperm.xlu0 %465, %v463
        %v467 = vpop.permute.xlu0 %466
        %v471 = vunpack.c.l.b16 %v460
        %v472 = vunpack.c.h.b16 %v460
        %v473 = vunpack.c.l.b16 %v461
        %v474 = vunpack.c.h.b16 %v461
        %v475 = vpack.c.b16 %v473, %v471
        %v476 = vpack.c.b16 %v474, %v472
        %vm479 = vcmask 130048
        %v481 = vsel %vm479, %v462, 0
        %483 = vmatprep.subr.bf16.mxu0 %v476
        %484 = vmatpush1.bf16.msra.mxu0 %v475
        %485 = vmatprep.subr.bf16.mxu0 0
        %486 = vmatpush1.bf16.msra.mxu0 0
        %487 = vmatprep.subr.bf16.mxu0 0
        %488 = vmatpush1.bf16.msra.mxu0 0
        %489 = vmatprep.subr.bf16.mxu0 0
        %490 = vmatpush1.bf16.msra.mxu0 0
        %491 = vmatprep.subr.bf16.mxu0 0
        %492 = vmatpush1.bf16.msra.mxu0 0
        %493 = vmatprep.subr.bf16.mxu0 0
        %494 = vmatpush1.bf16.msra.mxu0 0
        %495 = vmatprep.subr.bf16.mxu0 0
        %496 = vmatpush1.bf16.msra.mxu0 0
        %497 = vmatprep.subr.bf16.mxu0 0
        %498 = vmatpush1.bf16.msra.mxu0 0
        %499 = vmatprep.subr.bf16.mxu0 0
        %500 = vmatpush1.bf16.msra.mxu0 0
        %501 = vmatprep.subr.bf16.mxu0 0
        %502 = vmatpush1.bf16.msra.mxu0 0
        %503 = vmatprep.subr.bf16.mxu0 0
        %504 = vmatpush1.bf16.msra.mxu0 0
        %505 = vmatprep.subr.bf16.mxu0 0
        %506 = vmatpush1.bf16.msra.mxu0 0
        %507 = vmatprep.subr.bf16.mxu0 0
        %508 = vmatpush1.bf16.msra.mxu0 0
        %509 = vmatprep.subr.bf16.mxu0 0
        %510 = vmatpush1.bf16.msra.mxu0 0
        %511 = vmatprep.subr.bf16.mxu0 0
        %512 = vmatpush1.bf16.msra.mxu0 0
        %513 = vmatprep.subr.bf16.mxu0 0
        %514 = vmatpush1.bf16.msra.mxu0 0
        %515 = vmatprep.mubr.bf16.mxu0 0
        %516 = vmatmul.mubr.bf16.gmra.mrb[0].mxu0 %v481
        %v517 = vpop.f32.mrb[0].mxu0
        %v518 = vadd.f32 %v467, %v517
        %v519 = vpop.f32.mrb[0].mxu0
        %v520 = vadd.f32 %v467, %v519
        %v521 = vpop.f32.mrb[0].mxu0
        %v522 = vpop.f32.mrb[0].mxu0
        %523 = vdwg.mxu0
        %v524 = vpack.c.bf16 %v518, %v518
        %v525 = vpack.c.bf16 %v520, %v520
        %v526 = vld [vmem:[#allocation2] sm:$0xff]
        %v528 = vunpack.c.l.b16 %v526
        %v529 = vunpack.c.h.b16 %v526
        %v530 = vpack.c.b16 %v528, %v528
        %v531 = vpack.c.b16 %v529, %v529
        %534 = vxpose.xlu0.c.b16.start [1/8] %v530, 128
        %535 = vxpose.xlu0.c.b16.cont [2/8] 0, 128
        %536 = vxpose.xlu0.c.b16.cont [3/8] 0, 128
        %537 = vxpose.xlu0.c.b16.cont [4/8] 0, 128
        %538 = vxpose.xlu0.c.b16.cont [5/8] 0, 128
        %539 = vxpose.xlu0.c.b16.cont [6/8] 0, 128
        %540 = vxpose.xlu0.c.b16.cont [7/8] 0, 128
        %541 = vxpose.xlu0.c.b16.end [8/8] 0, 128
        %v542 = vpop.trf.xlu0
        %v543 = vpop.trf.xlu0
        %v544 = vpop.trf.xlu0
        %v545 = vpop.trf.xlu0
        %v546 = vpop.trf.xlu0
        %v547 = vpop.trf.xlu0
        %v548 = vpop.trf.xlu0
        %v549 = vpop.trf.xlu0
        %550 = vxpose.xlu0.c.b16.start [1/8] %v531, 128
        %551 = vxpose.xlu0.c.b16.cont [2/8] 0, 128
        %552 = vxpose.xlu0.c.b16.cont [3/8] 0, 128
        %553 = vxpose.xlu0.c.b16.cont [4/8] 0, 128
        %554 = vxpose.xlu0.c.b16.cont [5/8] 0, 128
        %555 = vxpose.xlu0.c.b16.cont [6/8] 0, 128
        %556 = vxpose.xlu0.c.b16.cont [7/8] 0, 128
        %557 = vxpose.xlu0.c.b16.end [8/8] 0, 128
        %v558 = vpop.trf.xlu0
        %v559 = vpop.trf.xlu0
        %v560 = vpop.trf.xlu0
        %v561 = vpop.trf.xlu0
        %v562 = vpop.trf.xlu0
        %v563 = vpop.trf.xlu0
        %v564 = vpop.trf.xlu0
        %v565 = vpop.trf.xlu0
        %vm566 = vcmask 64512
        %v568 = vsel %vm566, %v542, 0
        %v571 = vsel %vm566, %v543, 0
        %v574 = vsel %vm566, %v544, 0
        %v577 = vsel %vm566, %v545, 0
        %v580 = vsel %vm566, %v546, 0
        %v583 = vsel %vm566, %v547, 0
        %v586 = vsel %vm566, %v548, 0
        %v589 = vsel %vm566, %v549, 0
        %v592 = vsel %vm566, %v558, 0
        %v595 = vsel %vm566, %v559, 0
        %v598 = vsel %vm566, %v560, 0
        %v601 = vsel %vm566, %v561, 0
        %v604 = vsel %vm566, %v562, 0
        %v607 = vsel %vm566, %v563, 0
        %v610 = vsel %vm566, %v564, 0
        %v613 = vsel %vm566, %v565, 0
        %vm615 = vcmask 1043456
        %v617 = vsel %vm615, %v524, 0
        %v620 = vsel %vm615, %v525, 0
        %622 = vmatprep.subr.bf16.mxu0 %v620
        %623 = vmatpush1.bf16.msra.mxu0 %v617
        %624 = vmatprep.subr.bf16.mxu0 0
        %625 = vmatpush1.bf16.msra.mxu0 0
        %626 = vmatprep.subr.bf16.mxu0 0
        %627 = vmatpush1.bf16.msra.mxu0 0
        %628 = vmatprep.subr.bf16.mxu0 0
        %629 = vmatpush1.bf16.msra.mxu0 0
        %630 = vmatprep.subr.bf16.mxu0 0
        %631 = vmatpush1.bf16.msra.mxu0 0
        %632 = vmatprep.subr.bf16.mxu0 0
        %633 = vmatpush1.bf16.msra.mxu0 0
        %634 = vmatprep.subr.bf16.mxu0 0
        %635 = vmatpush1.bf16.msra.mxu0 0
        %636 = vmatprep.subr.bf16.mxu0 0
        %637 = vmatpush1.bf16.msra.mxu0 0
        %638 = vmatprep.subr.bf16.mxu0 0
        %639 = vmatpush1.bf16.msra.mxu0 0
        %640 = vmatprep.subr.bf16.mxu0 0
        %641 = vmatpush1.bf16.msra.mxu0 0
        %642 = vmatprep.subr.bf16.mxu0 0
        %643 = vmatpush1.bf16.msra.mxu0 0
        %644 = vmatprep.subr.bf16.mxu0 0
        %645 = vmatpush1.bf16.msra.mxu0 0
        %646 = vmatprep.subr.bf16.mxu0 0
        %647 = vmatpush1.bf16.msra.mxu0 0
        %648 = vmatprep.subr.bf16.mxu0 0
        %649 = vmatpush1.bf16.msra.mxu0 0
        %650 = vmatprep.subr.bf16.mxu0 0
        %651 = vmatpush1.bf16.msra.mxu0 0
        %652 = vmatprep.subr.bf16.mxu0 0
        %653 = vmatpush1.bf16.msra.mxu0 0
        %654 = vmatprep.mubr.bf16.mxu0 0
        %655 = vmatmul.mubr.bf16.gmra.mrb[0].mxu0 %v568
        %v656 = vpop.f32.mrb[0].mxu0
        %v657 = vadd.f32 0.0, %v656
        %v658 = vpop.f32.mrb[0].mxu0
        %v659 = vadd.f32 0.0, %v658
        %v660 = vpop.f32.mrb[0].mxu0
        %v661 = vadd.f32 0.0, %v660
        %v662 = vpop.f32.mrb[0].mxu0
        %v663 = vadd.f32 0.0, %v662
        %664 = vmatprep.mubr.bf16.mxu0 0
        %665 = vmatmul.mubr.bf16.gmra.mrb[0].mxu0 %v571
        %v666 = vpop.f32.mrb[0].mxu0
        %v667 = vadd.f32 0.0, %v666
        %v668 = vpop.f32.mrb[0].mxu0
        %v669 = vadd.f32 0.0, %v668
        %v670 = vpop.f32.mrb[0].mxu0
        %v671 = vadd.f32 0.0, %v670
        %v672 = vpop.f32.mrb[0].mxu0
        %v673 = vadd.f32 0.0, %v672
        %674 = vmatprep.mubr.bf16.mxu0 0
        %675 = vmatmul.mubr.bf16.gmra.mrb[0].mxu0 %v574
        %v676 = vpop.f32.mrb[0].mxu0
        %v677 = vadd.f32 0.0, %v676
        %v678 = vpop.f32.mrb[0].mxu0
        %v679 = vadd.f32 0.0, %v678
        %v680 = vpop.f32.mrb[0].mxu0
        %v681 = vadd.f32 0.0, %v680
        %v682 = vpop.f32.mrb[0].mxu0
        %v683 = vadd.f32 0.0, %v682
        %684 = vmatprep.mubr.bf16.mxu0 0
        %685 = vmatmul.mubr.bf16.gmra.mrb[0].mxu0 %v577
        %v686 = vpop.f32.mrb[0].mxu0
        %v687 = vadd.f32 0.0, %v686
        %v688 = vpop.f32.mrb[0].mxu0
        %v689 = vadd.f32 0.0, %v688
        %v690 = vpop.f32.mrb[0].mxu0
        %v691 = vadd.f32 0.0, %v690
        %v692 = vpop.f32.mrb[0].mxu0
        %v693 = vadd.f32 0.0, %v692
        %694 = vmatprep.mubr.bf16.mxu0 0
        %695 = vmatmul.mubr.bf16.gmra.mrb[0].mxu0 %v580
        %v696 = vpop.f32.mrb[0].mxu0
        %v697 = vadd.f32 0.0, %v696
        %v698 = vpop.f32.mrb[0].mxu0
        %v699 = vadd.f32 0.0, %v698
        %v700 = vpop.f32.mrb[0].mxu0
        %v701 = vadd.f32 0.0, %v700
        %v702 = vpop.f32.mrb[0].mxu0
        %v703 = vadd.f32 0.0, %v702
        %704 = vmatprep.mubr.bf16.mxu0 0
        %705 = vmatmul.mubr.bf16.gmra.mrb[0].mxu0 %v583
        %v706 = vpop.f32.mrb[0].mxu0
        %v707 = vadd.f32 0.0, %v706
        %v708 = vpop.f32.mrb[0].mxu0
        %v709 = vadd.f32 0.0, %v708
        %v710 = vpop.f32.mrb[0].mxu0
        %v711 = vadd.f32 0.0, %v710
        %v712 = vpop.f32.mrb[0].mxu0
        %v713 = vadd.f32 0.0, %v712
        %714 = vmatprep.mubr.bf16.mxu0 0
        %715 = vmatmul.mubr.bf16.gmra.mrb[0].mxu0 %v586
        %v716 = vpop.f32.mrb[0].mxu0
        %v717 = vadd.f32 0.0, %v716
        %v718 = vpop.f32.mrb[0].mxu0
        %v719 = vadd.f32 0.0, %v718
        %v720 = vpop.f32.mrb[0].mxu0
        %v721 = vadd.f32 0.0, %v720
        %v722 = vpop.f32.mrb[0].mxu0
        %v723 = vadd.f32 0.0, %v722
        %724 = vmatprep.mubr.bf16.mxu0 0
        %725 = vmatmul.mubr.bf16.gmra.mrb[0].mxu0 %v589
        %v726 = vpop.f32.mrb[0].mxu0
        %v727 = vadd.f32 0.0, %v726
        %v728 = vpop.f32.mrb[0].mxu0
        %v729 = vadd.f32 0.0, %v728
        %v730 = vpop.f32.mrb[0].mxu0
        %v731 = vadd.f32 0.0, %v730
        %v732 = vpop.f32.mrb[0].mxu0
        %v733 = vadd.f32 0.0, %v732
        %734 = vmatprep.mubr.bf16.mxu0 0
        %735 = vmatmul.mubr.bf16.gmra.mrb[0].mxu0 %v592
        %v736 = vpop.f32.mrb[0].mxu0
        %v737 = vadd.f32 0.0, %v736
        %v738 = vpop.f32.mrb[0].mxu0
        %v739 = vadd.f32 0.0, %v738
        %v740 = vpop.f32.mrb[0].mxu0
        %v741 = vadd.f32 0.0, %v740
        %v742 = vpop.f32.mrb[0].mxu0
        %v743 = vadd.f32 0.0, %v742
        %744 = vmatprep.mubr.bf16.mxu0 0
        %745 = vmatmul.mubr.bf16.gmra.mrb[0].mxu0 %v595
        %v746 = vpop.f32.mrb[0].mxu0
        %v747 = vadd.f32 0.0, %v746
        %v748 = vpop.f32.mrb[0].mxu0
        %v749 = vadd.f32 0.0, %v748
        %v750 = vpop.f32.mrb[0].mxu0
        %v751 = vadd.f32 0.0, %v750
        %v752 = vpop.f32.mrb[0].mxu0
        %v753 = vadd.f32 0.0, %v752
        %754 = vmatprep.mubr.bf16.mxu0 0
        %755 = vmatmul.mubr.bf16.gmra.mrb[0].mxu0 %v598
        %v756 = vpop.f32.mrb[0].mxu0
        %v757 = vadd.f32 0.0, %v756
        %v758 = vpop.f32.mrb[0].mxu0
        %v759 = vadd.f32 0.0, %v758
        %v760 = vpop.f32.mrb[0].mxu0
        %v761 = vadd.f32 0.0, %v760
        %v762 = vpop.f32.mrb[0].mxu0
        %v763 = vadd.f32 0.0, %v762
        %764 = vmatprep.mubr.bf16.mxu0 0
        %765 = vmatmul.mubr.bf16.gmra.mrb[0].mxu0 %v601
        %v766 = vpop.f32.mrb[0].mxu0
        %v767 = vadd.f32 0.0, %v766
        %v768 = vpop.f32.mrb[0].mxu0
        %v769 = vadd.f32 0.0, %v768
        %v770 = vpop.f32.mrb[0].mxu0
        %v771 = vadd.f32 0.0, %v770
        %v772 = vpop.f32.mrb[0].mxu0
        %v773 = vadd.f32 0.0, %v772
        %774 = vmatprep.mubr.bf16.mxu0 0
        %775 = vmatmul.mubr.bf16.gmra.mrb[0].mxu0 %v604
        %v776 = vpop.f32.mrb[0].mxu0
        %v777 = vadd.f32 0.0, %v776
        %v778 = vpop.f32.mrb[0].mxu0
        %v779 = vadd.f32 0.0, %v778
        %v780 = vpop.f32.mrb[0].mxu0
        %v781 = vadd.f32 0.0, %v780
        %v782 = vpop.f32.mrb[0].mxu0
        %v783 = vadd.f32 0.0, %v782
        %784 = vmatprep.mubr.bf16.mxu0 0
        %785 = vmatmul.mubr.bf16.gmra.mrb[0].mxu0 %v607
        %v786 = vpop.f32.mrb[0].mxu0
        %v787 = vadd.f32 0.0, %v786
        %v788 = vpop.f32.mrb[0].mxu0
        %v789 = vadd.f32 0.0, %v788
        %v790 = vpop.f32.mrb[0].mxu0
        %v791 = vadd.f32 0.0, %v790
        %v792 = vpop.f32.mrb[0].mxu0
        %v793 = vadd.f32 0.0, %v792
        %794 = vmatprep.mubr.bf16.mxu0 0
        %795 = vmatmul.mubr.bf16.gmra.mrb[0].mxu0 %v610
        %v796 = vpop.f32.mrb[0].mxu0
        %v797 = vadd.f32 0.0, %v796
        %v798 = vpop.f32.mrb[0].mxu0
        %v799 = vadd.f32 0.0, %v798
        %v800 = vpop.f32.mrb[0].mxu0
        %v801 = vadd.f32 0.0, %v800
        %v802 = vpop.f32.mrb[0].mxu0
        %v803 = vadd.f32 0.0, %v802
        %804 = vmatprep.mubr.bf16.mxu0 0
        %805 = vmatmul.mubr.bf16.gmra.mrb[0].mxu0 %v613
        %v806 = vpop.f32.mrb[0].mxu0
        %v807 = vadd.f32 0.0, %v806
        %v808 = vpop.f32.mrb[0].mxu0
        %v809 = vadd.f32 0.0, %v808
        %v810 = vpop.f32.mrb[0].mxu0
        %v811 = vadd.f32 0.0, %v810
        %v812 = vpop.f32.mrb[0].mxu0
        %v813 = vadd.f32 0.0, %v812
        %814 = vdwg.mxu0
        %v815 = vmax.f32 %v657, %v667
        %v816 = vmax.f32 %v661, %v671
        %v817 = vmax.f32 %v815, %v677
        %v818 = vmax.f32 %v816, %v681
        %v819 = vmax.f32 %v817, %v687
        %v820 = vmax.f32 %v818, %v691
        %v821 = vmax.f32 %v819, %v697
        %v822 = vmax.f32 %v820, %v701
        %v823 = vmax.f32 %v821, %v707
        %v824 = vmax.f32 %v822, %v711
        %v825 = vmax.f32 %v823, %v717
        %v826 = vmax.f32 %v824, %v721
        %v827 = vmax.f32 %v825, %v727
        %v828 = vmax.f32 %v826, %v731
        %v829 = vmax.f32 %v827, %v737
        %v830 = vmax.f32 %v828, %v741
        %v831 = vmax.f32 %v829, %v747
        %v832 = vmax.f32 %v830, %v751
        %v833 = vmax.f32 %v831, %v757
        %v834 = vmax.f32 %v832, %v761
        %v835 = vmax.f32 %v833, %v767
        %v836 = vmax.f32 %v834, %v771
        %v837 = vmax.f32 %v835, %v777
        %v838 = vmax.f32 %v836, %v781
        %v839 = vmax.f32 %v837, %v787
        %v840 = vmax.f32 %v838, %v791
        %v841 = vmax.f32 %v839, %v797
        %v842 = vmax.f32 %v840, %v801
        %v843 = vmax.f32 %v841, %v807
        %v844 = vmax.f32 %v842, %v811
        %v845 = vmax.f32 %v843, %v844
        %v846 = vrot.slane %v845, 4
        %v847 = vmax.f32 %v845, %v846
        %v848 = vrot.slane %v847, 2
        %v849 = vmax.f32 %v847, %v848
        %v850 = vrot.slane %v849, 1
        %v851 = vmax.f32 %v849, %v850
        %v852 = vmax.f32 %v659, %v669
        %v853 = vmax.f32 %v663, %v673
        %v854 = vmax.f32 %v852, %v679
        %v855 = vmax.f32 %v853, %v683
        %v856 = vmax.f32 %v854, %v689
        %v857 = vmax.f32 %v855, %v693
        %v858 = vmax.f32 %v856, %v699
        %v859 = vmax.f32 %v857, %v703
        %v860 = vmax.f32 %v858, %v709
        %v861 = vmax.f32 %v859, %v713
        %v862 = vmax.f32 %v860, %v719
        %v863 = vmax.f32 %v861, %v723
        %v864 = vmax.f32 %v862, %v729
        %v865 = vmax.f32 %v863, %v733
        %v866 = vmax.f32 %v864, %v739
        %v867 = vmax.f32 %v865, %v743
        %v868 = vmax.f32 %v866, %v749
        %v869 = vmax.f32 %v867, %v753
        %v870 = vmax.f32 %v868, %v759
        %v871 = vmax.f32 %v869, %v763
        %v872 = vmax.f32 %v870, %v769
        %v873 = vmax.f32 %v871, %v773
        %v874 = vmax.f32 %v872, %v779
        %v875 = vmax.f32 %v873, %v783
        %v876 = vmax.f32 %v874, %v789
        %v877 = vmax.f32 %v875, %v793
        %v878 = vmax.f32 %v876, %v799
        %v879 = vmax.f32 %v877, %v803
        %v880 = vmax.f32 %v878, %v809
        %v881 = vmax.f32 %v879, %v813
        %v882 = vmax.f32 %v880, %v881
        %v883 = vrot.slane %v882, 4
        %v884 = vmax.f32 %v882, %v883
        %v885 = vrot.slane %v884, 2
        %v886 = vmax.f32 %v884, %v885
        %v887 = vrot.slane %v886, 1
        %v888 = vmax.f32 %v886, %v887
        %v889 = vsub.f32 %v657, %v851
        %v890 = vsub.f32 %v659, %v888
        %v891 = vsub.f32 %v661, %v851
        %v892 = vsub.f32 %v663, %v888
        %v893 = vsub.f32 %v667, %v851
        %v894 = vsub.f32 %v669, %v888
        %v895 = vsub.f32 %v671, %v851
        %v896 = vsub.f32 %v673, %v888
        %v897 = vsub.f32 %v677, %v851
        %v898 = vsub.f32 %v679, %v888
        %v899 = vsub.f32 %v681, %v851
        %v900 = vsub.f32 %v683, %v888
        %v901 = vsub.f32 %v687, %v851
        %v902 = vsub.f32 %v689, %v888
        %v903 = vsub.f32 %v691, %v851
        %v904 = vsub.f32 %v693, %v888
        %v905 = vsub.f32 %v697, %v851
        %v906 = vsub.f32 %v699, %v888
        %v907 = vsub.f32 %v701, %v851
        %v908 = vsub.f32 %v703, %v888
        %v909 = vsub.f32 %v707, %v851
        %v910 = vsub.f32 %v709, %v888
        %v911 = vsub.f32 %v711, %v851
        %v912 = vsub.f32 %v713, %v888
        %v913 = vsub.f32 %v717, %v851
        %v914 = vsub.f32 %v719, %v888
        %v915 = vsub.f32 %v721, %v851
        %v916 = vsub.f32 %v723, %v888
        %v917 = vsub.f32 %v727, %v851
        %v918 = vsub.f32 %v729, %v888
        %v919 = vsub.f32 %v731, %v851
        %v920 = vsub.f32 %v733, %v888
        %v921 = vsub.f32 %v737, %v851
        %v922 = vsub.f32 %v739, %v888
        %v923 = vsub.f32 %v741, %v851
        %v924 = vsub.f32 %v743, %v888
        %v925 = vsub.f32 %v747, %v851
        %v926 = vsub.f32 %v749, %v888
        %v927 = vsub.f32 %v751, %v851
        %v928 = vsub.f32 %v753, %v888
        %v929 = vsub.f32 %v757, %v851
        %v930 = vsub.f32 %v759, %v888
        %v931 = vsub.f32 %v761, %v851
        %v932 = vsub.f32 %v763, %v888
        %v933 = vsub.f32 %v767, %v851
        %v934 = vsub.f32 %v769, %v888
        %v935 = vsub.f32 %v771, %v851
        %v936 = vsub.f32 %v773, %v888
        %v937 = vsub.f32 %v777, %v851
        %v938 = vsub.f32 %v779, %v888
        %v939 = vsub.f32 %v781, %v851
        %v940 = vsub.f32 %v783, %v888
        %v941 = vsub.f32 %v787, %v851
        %v942 = vsub.f32 %v789, %v888
        %v943 = vsub.f32 %v791, %v851
        %v944 = vsub.f32 %v793, %v888
        %v945 = vsub.f32 %v797, %v851
        %v946 = vsub.f32 %v799, %v888
        %v947 = vsub.f32 %v801, %v851
        %v948 = vsub.f32 %v803, %v888
        %v949 = vsub.f32 %v807, %v851
        %v950 = vsub.f32 %v809, %v888
        %v951 = vsub.f32 %v811, %v851
        %v952 = vsub.f32 %v813, %v888
        %v953 = vpack.c.bf16 %v891, %v889
        %v954 = vpack.c.bf16 %v892, %v890
        %v955 = vpack.c.bf16 %v895, %v893
        %v956 = vpack.c.bf16 %v896, %v894
        %v957 = vpack.c.bf16 %v899, %v897
        %v958 = vpack.c.bf16 %v900, %v898
        %v959 = vpack.c.bf16 %v903, %v901
        %v960 = vpack.c.bf16 %v904, %v902
        %v961 = vpack.c.bf16 %v907, %v905
        %v962 = vpack.c.bf16 %v908, %v906
        %v963 = vpack.c.bf16 %v911, %v909
        %v964 = vpack.c.bf16 %v912, %v910
        %v965 = vpack.c.bf16 %v915, %v913
        %v966 = vpack.c.bf16 %v916, %v914
        %v967 = vpack.c.bf16 %v919, %v917
        %v968 = vpack.c.bf16 %v920, %v918
        %v969 = vpack.c.bf16 %v923, %v921
        %v970 = vpack.c.bf16 %v924, %v922
        %v971 = vpack.c.bf16 %v927, %v925
        %v972 = vpack.c.bf16 %v928, %v926
        %v973 = vpack.c.bf16 %v931, %v929
        %v974 = vpack.c.bf16 %v932, %v930
        %v975 = vpack.c.bf16 %v935, %v933
        %v976 = vpack.c.bf16 %v936, %v934
        %v977 = vpack.c.bf16 %v939, %v937
        %v978 = vpack.c.bf16 %v940, %v938
        %v979 = vpack.c.bf16 %v943, %v941
        %v980 = vpack.c.bf16 %v944, %v942
        %v981 = vpack.c.bf16 %v947, %v945
        %v982 = vpack.c.bf16 %v948, %v946
        %v983 = vpack.c.bf16 %v951, %v949
        %v984 = vpack.c.bf16 %v952, %v950
        %v986 = vmul.bf16 %v953, 1069105081
        %v987 = vpow.bf16.pop %v986
        %v989 = vmul.bf16 %v954, 1069105081
        %v990 = vpow.bf16.pop %v989
        %v992 = vmul.bf16 %v955, 1069105081
        %v993 = vpow.bf16.pop %v992
        %v995 = vmul.bf16 %v956, 1069105081
        %v996 = vpow.bf16.pop %v995
        %v998 = vmul.bf16 %v957, 1069105081
        %v999 = vpow.bf16.pop %v998
        %v1001 = vmul.bf16 %v958, 1069105081
        %v1002 = vpow.bf16.pop %v1001
        %v1004 = vmul.bf16 %v959, 1069105081
        %v1005 = vpow.bf16.pop %v1004
        %v1007 = vmul.bf16 %v960, 1069105081
        %v1008 = vpow.bf16.pop %v1007
        %v1010 = vmul.bf16 %v961, 1069105081
        %v1011 = vpow.bf16.pop %v1010
        %v1013 = vmul.bf16 %v962, 1069105081
        %v1014 = vpow.bf16.pop %v1013
        %v1016 = vmul.bf16 %v963, 1069105081
        %v1017 = vpow.bf16.pop %v1016
        %v1019 = vmul.bf16 %v964, 1069105081
        %v1020 = vpow.bf16.pop %v1019
        %v1022 = vmul.bf16 %v965, 1069105081
        %v1023 = vpow.bf16.pop %v1022
        %v1025 = vmul.bf16 %v966, 1069105081
        %v1026 = vpow.bf16.pop %v1025
        %v1028 = vmul.bf16 %v967, 1069105081
        %v1029 = vpow.bf16.pop %v1028
        %v1031 = vmul.bf16 %v968, 1069105081
        %v1032 = vpow.bf16.pop %v1031
        %v1034 = vmul.bf16 %v969, 1069105081
        %v1035 = vpow.bf16.pop %v1034
        %v1037 = vmul.bf16 %v970, 1069105081
        %v1038 = vpow.bf16.pop %v1037
        %v1040 = vmul.bf16 %v971, 1069105081
        %v1041 = vpow.bf16.pop %v1040
        %v1043 = vmul.bf16 %v972, 1069105081
        %v1044 = vpow.bf16.pop %v1043
        %v1046 = vmul.bf16 %v973, 1069105081
        %v1047 = vpow.bf16.pop %v1046
        %v1049 = vmul.bf16 %v974, 1069105081
        %v1050 = vpow.bf16.pop %v1049
        %v1052 = vmul.bf16 %v975, 1069105081
        %v1053 = vpow.bf16.pop %v1052
        %v1055 = vmul.bf16 %v976, 1069105081
        %v1056 = vpow.bf16.pop %v1055
        %v1058 = vmul.bf16 %v977, 1069105081
        %v1059 = vpow.bf16.pop %v1058
        %v1061 = vmul.bf16 %v978, 1069105081
        %v1062 = vpow.bf16.pop %v1061
        %v1064 = vmul.bf16 %v979, 1069105081
        %v1065 = vpow.bf16.pop %v1064
        %v1067 = vmul.bf16 %v980, 1069105081
        %v1068 = vpow.bf16.pop %v1067
        %v1070 = vmul.bf16 %v981, 1069105081
        %v1071 = vpow.bf16.pop %v1070
        %v1073 = vmul.bf16 %v982, 1069105081
        %v1074 = vpow.bf16.pop %v1073
        %v1076 = vmul.bf16 %v983, 1069105081
        %v1077 = vpow.bf16.pop %v1076
        %v1079 = vmul.bf16 %v984, 1069105081
        %v1080 = vpow.bf16.pop %v1079
        %v1081 = vunpack.c.l.bf16 %v987
        %v1082 = vunpack.c.l.bf16 %v990
        %v1083 = vunpack.c.h.bf16 %v987
        %v1084 = vunpack.c.h.bf16 %v990
        %v1085 = vunpack.c.l.bf16 %v993
        %v1086 = vunpack.c.l.bf16 %v996
        %v1087 = vunpack.c.h.bf16 %v993
        %v1088 = vunpack.c.h.bf16 %v996
        %v1089 = vunpack.c.l.bf16 %v999
        %v1090 = vunpack.c.l.bf16 %v1002
        %v1091 = vunpack.c.h.bf16 %v999
        %v1092 = vunpack.c.h.bf16 %v1002
        %v1093 = vunpack.c.l.bf16 %v1005
        %v1094 = vunpack.c.l.bf16 %v1008
        %v1095 = vunpack.c.h.bf16 %v1005
        %v1096 = vunpack.c.h.bf16 %v1008
        %v1097 = vunpack.c.l.bf16 %v1011
        %v1098 = vunpack.c.l.bf16 %v1014
        %v1099 = vunpack.c.h.bf16 %v1011
        %v1100 = vunpack.c.h.bf16 %v1014
        %v1101 = vunpack.c.l.bf16 %v1017
        %v1102 = vunpack.c.l.bf16 %v1020
        %v1103 = vunpack.c.h.bf16 %v1017
        %v1104 = vunpack.c.h.bf16 %v1020
        %v1105 = vunpack.c.l.bf16 %v1023
        %v1106 = vunpack.c.l.bf16 %v1026
        %v1107 = vunpack.c.h.bf16 %v1023
        %v1108 = vunpack.c.h.bf16 %v1026
        %v1109 = vunpack.c.l.bf16 %v1029
        %v1110 = vunpack.c.l.bf16 %v1032
        %v1111 = vunpack.c.h.bf16 %v1029
        %v1112 = vunpack.c.h.bf16 %v1032
        %v1113 = vunpack.c.l.bf16 %v1035
        %v1114 = vunpack.c.l.bf16 %v1038
        %v1115 = vunpack.c.h.bf16 %v1035
        %v1116 = vunpack.c.h.bf16 %v1038
        %v1117 = vunpack.c.l.bf16 %v1041
        %v1118 = vunpack.c.l.bf16 %v1044
        %v1119 = vunpack.c.h.bf16 %v1041
        %v1120 = vunpack.c.h.bf16 %v1044
        %v1121 = vunpack.c.l.bf16 %v1047
        %v1122 = vunpack.c.l.bf16 %v1050
        %v1123 = vunpack.c.h.bf16 %v1047
        %v1124 = vunpack.c.h.bf16 %v1050
        %v1125 = vunpack.c.l.bf16 %v1053
        %v1126 = vunpack.c.l.bf16 %v1056
        %v1127 = vunpack.c.h.bf16 %v1053
        %v1128 = vunpack.c.h.bf16 %v1056
        %v1129 = vunpack.c.l.bf16 %v1059
        %v1130 = vunpack.c.l.bf16 %v1062
        %v1131 = vunpack.c.h.bf16 %v1059
        %v1132 = vunpack.c.h.bf16 %v1062
        %v1133 = vunpack.c.l.bf16 %v1065
        %v1134 = vunpack.c.l.bf16 %v1068
        %v1135 = vunpack.c.h.bf16 %v1065
        %v1136 = vunpack.c.h.bf16 %v1068
        %v1137 = vunpack.c.l.bf16 %v1071
        %v1138 = vunpack.c.l.bf16 %v1074
        %v1139 = vunpack.c.h.bf16 %v1071
        %v1140 = vunpack.c.h.bf16 %v1074
        %v1141 = vunpack.c.l.bf16 %v1077
        %v1142 = vunpack.c.l.bf16 %v1080
        %v1143 = vunpack.c.h.bf16 %v1077
        %v1144 = vunpack.c.h.bf16 %v1080
        %v1145 = vadd.f32 %v1081, %v1083
        %v1146 = vadd.f32 %v1145, %v1085
        %v1147 = vadd.f32 %v1146, %v1087
        %v1148 = vadd.f32 %v1147, %v1089
        %v1149 = vadd.f32 %v1148, %v1091
        %v1150 = vadd.f32 %v1149, %v1093
        %v1151 = vadd.f32 %v1150, %v1095
        %v1152 = vadd.f32 %v1151, %v1097
        %v1153 = vadd.f32 %v1152, %v1099
        %v1154 = vadd.f32 %v1153, %v1101
        %v1155 = vadd.f32 %v1154, %v1103
        %v1156 = vadd.f32 %v1155, %v1105
        %v1157 = vadd.f32 %v1156, %v1107
        %v1158 = vadd.f32 %v1157, %v1109
        %v1159 = vadd.f32 %v1158, %v1111
        %v1160 = vadd.f32 %v1159, %v1113
        %v1161 = vadd.f32 %v1160, %v1115
        %v1162 = vadd.f32 %v1161, %v1117
        %v1163 = vadd.f32 %v1162, %v1119
        %v1164 = vadd.f32 %v1163, %v1121
        %v1165 = vadd.f32 %v1164, %v1123
        %v1166 = vadd.f32 %v1165, %v1125
        %v1167 = vadd.f32 %v1166, %v1127
        %v1168 = vadd.f32 %v1167, %v1129
        %v1169 = vadd.f32 %v1168, %v1131
        %v1170 = vadd.f32 %v1169, %v1133
        %v1171 = vadd.f32 %v1170, %v1135
        %v1172 = vadd.f32 %v1171, %v1137
        %v1173 = vadd.f32 %v1172, %v1139
        %v1174 = vadd.f32 %v1173, %v1141
        %v1175 = vadd.f32 %v1174, %v1143
        %v1176 = vrot.slane %v1175, 4
        %v1177 = vadd.f32 %v1175, %v1176
        %v1178 = vrot.slane %v1177, 2
        %v1179 = vadd.f32 %v1177, %v1178
        %v1180 = vrot.slane %v1179, 1
        %v1181 = vadd.f32 %v1179, %v1180
        %v1182 = vadd.f32 %v1082, %v1084
        %v1183 = vadd.f32 %v1182, %v1086
        %v1184 = vadd.f32 %v1183, %v1088
        %v1185 = vadd.f32 %v1184, %v1090
        %v1186 = vadd.f32 %v1185, %v1092
        %v1187 = vadd.f32 %v1186, %v1094
        %v1188 = vadd.f32 %v1187, %v1096
        %v1189 = vadd.f32 %v1188, %v1098
        %v1190 = vadd.f32 %v1189, %v1100
        %v1191 = vadd.f32 %v1190, %v1102
        %v1192 = vadd.f32 %v1191, %v1104
        %v1193 = vadd.f32 %v1192, %v1106
        %v1194 = vadd.f32 %v1193, %v1108
        %v1195 = vadd.f32 %v1194, %v1110
        %v1196 = vadd.f32 %v1195, %v1112
        %v1197 = vadd.f32 %v1196, %v1114
        %v1198 = vadd.f32 %v1197, %v1116
        %v1199 = vadd.f32 %v1198, %v1118
        %v1200 = vadd.f32 %v1199, %v1120
        %v1201 = vadd.f32 %v1200, %v1122
        %v1202 = vadd.f32 %v1201, %v1124
        %v1203 = vadd.f32 %v1202, %v1126
        %v1204 = vadd.f32 %v1203, %v1128
        %v1205 = vadd.f32 %v1204, %v1130
        %v1206 = vadd.f32 %v1205, %v1132
        %v1207 = vadd.f32 %v1206, %v1134
        %v1208 = vadd.f32 %v1207, %v1136
        %v1209 = vadd.f32 %v1208, %v1138
        %v1210 = vadd.f32 %v1209, %v1140
        %v1211 = vadd.f32 %v1210, %v1142
        %v1212 = vadd.f32 %v1211, %v1144
        %v1213 = vrot.slane %v1212, 4
        %v1214 = vadd.f32 %v1212, %v1213
        %v1215 = vrot.slane %v1214, 2
        %v1216 = vadd.f32 %v1214, %v1215
        %v1217 = vrot.slane %v1216, 1
        %v1218 = vadd.f32 %v1216, %v1217
        %v1219 = vld [vmem:[#allocation3] sm:$0xff]
        %v1220 = vld [vmem:[#allocation3 + $0x8] sm:$0xff]
        %1221 = vmatprep.subr.bf16.mxu0 %v990
        %1222 = vmatpush1.bf16.msra.mxu0 %v987
        %1223 = vmatprep.subr.bf16.mxu0 %v996
        %1224 = vmatpush1.bf16.msra.mxu0 %v993
        %1225 = vmatprep.subr.bf16.mxu0 %v1002
        %1226 = vmatpush1.bf16.msra.mxu0 %v999
        %1227 = vmatprep.subr.bf16.mxu0 %v1008
        %1228 = vmatpush1.bf16.msra.mxu0 %v1005
        %1229 = vmatprep.subr.bf16.mxu0 %v1014
        %1230 = vmatpush1.bf16.msra.mxu0 %v1011
        %1231 = vmatprep.subr.bf16.mxu0 %v1020
        %1232 = vmatpush1.bf16.msra.mxu0 %v1017
        %1233 = vmatprep.subr.bf16.mxu0 %v1026
        %1234 = vmatpush1.bf16.msra.mxu0 %v1023
        %1235 = vmatprep.subr.bf16.mxu0 %v1032
        %1236 = vmatpush1.bf16.msra.mxu0 %v1029
        %1237 = vmatprep.subr.bf16.mxu0 %v1038
        %1238 = vmatpush1.bf16.msra.mxu0 %v1035
        %1239 = vmatprep.subr.bf16.mxu0 %v1044
        %1240 = vmatpush1.bf16.msra.mxu0 %v1041
        %1241 = vmatprep.subr.bf16.mxu0 %v1050
        %1242 = vmatpush1.bf16.msra.mxu0 %v1047
        %1243 = vmatprep.subr.bf16.mxu0 %v1056
        %1244 = vmatpush1.bf16.msra.mxu0 %v1053
        %1245 = vmatprep.subr.bf16.mxu0 %v1062
        %1246 = vmatpush1.bf16.msra.mxu0 %v1059
        %1247 = vmatprep.subr.bf16.mxu0 %v1068
        %1248 = vmatpush1.bf16.msra.mxu0 %v1065
        %1249 = vmatprep.subr.bf16.mxu0 %v1074
        %1250 = vmatpush1.bf16.msra.mxu0 %v1071
        %1251 = vmatprep.subr.bf16.mxu0 %v1080
        %1252 = vmatpush1.bf16.msra.mxu0 %v1077
        %1253 = vmatprep.mubr.bf16.mxu0 %v1220
        %1254 = vmatmul.mubr.bf16.gmra.mrb[0].mxu0 %v1219
        %v1255 = vpop.f32.mrb[0].mxu0
        %v1256 = vadd.f32 0.0, %v1255
        %v1257 = vpop.f32.mrb[0].mxu0
        %v1258 = vadd.f32 0.0, %v1257
        %v1259 = vpop.f32.mrb[0].mxu0
        %v1260 = vadd.f32 0.0, %v1259
        %v1261 = vpop.f32.mrb[0].mxu0
        %v1262 = vadd.f32 0.0, %v1261
        %1263 = vdwg.mxu0
        %s1264 = sld [smem:[#allocation4]]
        %v1265 = vrcp.pop %v1181
        %v1266 = vrcp.pop %v1218
        %v1267 = vstv %s1264
        %v1268 = vmul.f32 %v1267, %v1265
        %v1269 = vmul.f32 %v1267, %v1266
        %v1270 = vmul.f32 %v1268, %v1256
        %v1271 = vmul.f32 %v1269, %v1258
        %v1272 = vmul.f32 %v1268, %v1260
        %v1273 = vmul.f32 %v1269, %v1262
        %v1274 = vld [vmem:[%s295] sm:$0xff]
        %v1275 = vld [vmem:[%s295 + $0x8] sm:$0xff]
        %v1276 = vld [vmem:[%s295 + $0x10] sm:$0xff]
        %v1277 = vld [vmem:[%s295 + $0x18] sm:$0xff]
        %v1278 = vadd.f32 %v1270, %v1274
        %v1279 = vadd.f32 %v1271, %v1275
        %v1280 = vadd.f32 %v1272, %v1276
        %v1281 = vadd.f32 %v1273, %v1277
        %1282 = vst [vmem:[%s330] sm:$0xff] %v1278
        %1283 = vst [vmem:[%s330 + $0x8] sm:$0xff] %v1279
        %1284 = vst [vmem:[%s330 + $0x10] sm:$0xff] %v1280
        %1285 = vst [vmem:[%s330 + $0x18] sm:$0xff] %v1281
        %s1286 = sand.u32 %s206, 1
        %s1287 = scalar_lea.sflag [#allocation7], %s1286
        %s1288 = sand.u32 %s206, 1
        %s1289 = smul.addr %s1288, 32
        %s1290 = scalar_lea.vmem [#allocation8], %s1289
        // Predicated region
        $region57: #{tpu_custom_call.1} parent=47 // pred_check
          %p1291 = pneg %p216
        $region58: #{tpu_custom_call.1} parent=47 // pred_check_branch
          %1293 = sbr.rel (%p1291) target = $region60
        $region59: #{tpu_custom_call.1} parent=47 // pred_region
          %s1294 = smul.u32 2, %s30
          %s1296 = ssub.s32 512, 512
          %1297 = vsyncadd %s1287, %s1296
          %s1298 = smul.addr %s29, 4
          %s1299 = sadd.s32 %s1294, %s1298
          %s1300 = smul.addr %s1299, 128
          %s1301 = scalar_lea.hbm %s7, %s1300
          %s1302 = sshll.u32 %s1290, 4
          %s1303 = int_to_ptr.vmem [resolvable:$true] %s1302
          %1308 = dma.vmem_to_hbm [thread:$0]  %s1303, 512, %s1301, %s1287, 256, 256, 16
        $region60: #{tpu_custom_call.1} parent=47 // pred_fallthru
          _
      $region48: #{tpu_custom_call.1} parent=5 // pred_fallthru
        _
      %p1309 = scmp.le.s32.totalorder 2, %s20
      // Predicated region
      $region61: #{tpu_custom_call.1} parent=5 // pred_check
        %p1310 = pneg %p1309
      $region62: #{tpu_custom_call.1} parent=5 // pred_check_branch
        %1312 = sbr.rel (%p1310) target = $region64
      $region63: #{tpu_custom_call.1} parent=5 // pred_region
        %s1313 = ssub.s32 %s20, 2
        // Predicated region
        $region65: #{tpu_custom_call.1} parent=63 // pred_check
          %p1314 = pneg %p222
        $region66: #{tpu_custom_call.1} parent=63 // pred_check_branch
          %1316 = sbr.rel (%p1314) target = $region68
        $region67: #{tpu_custom_call.1} parent=63 // pred_region
          %s1317 = sand.u32 %s207, 1
          %s1318 = scalar_lea.sflag [#allocation7], %s1317
          %s1319 = sand.u32 %s207, 1
          %s1320 = smul.addr %s1319, 32
          %s1321 = scalar_lea.vmem [#allocation8], %s1320
          %1322 = dma.done %s1318, 512
        $region68: #{tpu_custom_call.1} parent=63 // pred_fallthru
          _
      $region64: #{tpu_custom_call.1} parent=5 // pred_fallthru
        _
    $region6: #{tpu_custom_call.1} parent=1 // loop_footer
      %s24 = sadd.s32 1, %s20
    $region7: #{tpu_custom_call.1} parent=1 // loop_footer_branch
      %19 = sbr.rel target = $region3
    $region8: #{tpu_custom_call.1} parent=1 // loop_exit
      _
    %1323 = vsyncpa [#allocation6], 1
    %s1324 = scalar_lea.sflag [#allocation6], 1
    %1325 = vsyncpa %s1324, 1
    %1326 = vsyncpa [#allocation7], 1
    %s1327 = scalar_lea.sflag [#allocation7], 1
    %1328 = vsyncpa %s1327, 1

</llo_original>
